<compile_context>
chip_gen: v7x
topology: tpu7x:2x2x1
jax: 0.10.0
libtpu: 0.0.40
codegen_flags: <defaults>
</compile_context>

<pallas_src>
import functools

import jax
import jax.numpy as jnp
from jax.experimental import pallas as pl
from jax.experimental.pallas import tpu as pltpu

_LANES = 128


def _round_up(x: int, m: int) -> int:
    return -(-x // m) * m


def _exp_kernel(x_ref, o_ref):
    # Elementwise exp on the current VMEM tile (EUP transcendental).
    o_ref[...] = jnp.exp(x_ref[...])


@functools.lru_cache(maxsize=1)
def _chip_config():
    """Best-effort TPU generation probe -> (num_tensorcores, block_bytes, vmem_cap)."""
    kind = ""
    try:
        kind = jax.devices()[0].device_kind.lower()
    except Exception:  # no devices / non-TPU backend: fall through to defaults
        pass
    is_v7 = ("v7" in kind) or ("7x" in kind)
    is_v5_v6 = any(tag in kind for tag in ("v5", "v6"))
    if is_v7:
        # 2 TCs, 64 MiB VMEM/TC: 8 MiB blocks -> 4 live (in+out double-buffered) = 32 MiB.
        return 2, 8 * 1024 * 1024, 48 * 1024 * 1024
    if is_v5_v6:
        # 1 TC, 128 MiB VMEM: 16 MiB blocks -> 4 live blocks = 64 MiB.
        return 1, 16 * 1024 * 1024, 100 * 1024 * 1024
    # Unknown generation: conservative defaults.
    return 1, 4 * 1024 * 1024, 32 * 1024 * 1024


def exponential(x: jax.Array, *, min_pallas_elems: int = 1 << 16) -> jax.Array:
    """Elementwise exp via a Pallas TPU kernel. Matches torch.exp(x)."""
    orig_shape = x.shape
    orig_dtype = x.dtype
    n = x.size

    # Tiny arrays: fused XLA exp beats pallas_call fixed overhead.
    # Unaligned flat length: pad + slice would add extra HBM passes -> let XLA do it.
    if n == 0 or n < min_pallas_elems or n % _LANES != 0:
        return jnp.exp(x)

    num_cores, target_block_bytes, vmem_cap = _chip_config()

    rows = n // _LANES
    itemsize = x.dtype.itemsize
    # Sublane alignment: 8 rows for 32-bit dtypes, 16 for bf16, 32 for int8.
    sub = max(8, 32 // itemsize)
    max_tile_rows = max(sub, (target_block_bytes // (_LANES * itemsize)) // sub * sub)

    if num_cores >= 2:
        # v7x: even, balanced grid so both TensorCores get equal work.
        if rows <= 2 * sub:
            tr = rows                                   # full-extent block (small input)
        else:
            tr = min(max_tile_rows, _round_up(pl.cdiv(rows, 2), sub))
            g = pl.cdiv(rows, tr)
            if g > 1 and g % 2:                         # avoid an odd step count
                tr_even = _round_up(pl.cdiv(rows, g + 1), sub)
                if tr_even >= sub and pl.cdiv(rows, tr_even) % 2 == 0:
                    tr = tr_even
    else:
        # Single-TC chips (v5e/v6e): split only for DMA/compute pipeline overlap.
        if rows <= 4 * sub:
            tr = rows                                   # full-extent block (small input)
        else:
            tr = min(max_tile_rows, _round_up(pl.cdiv(rows, 4), sub))

    grid = (pl.cdiv(rows, tr),)                         # partial last block handled by Pallas
    block_bytes = tr * _LANES * itemsize
    # In + out double buffering -> ~4 live blocks; margin for compiler scratch,
    # capped per generation (<=48 MiB on v7x's 64 MiB, <=100 MiB on v5e/v6e's 128 MiB).
    vmem_limit = int(min(vmem_cap, 4 * block_bytes + 8 * 1024 * 1024))

    core_parallel = getattr(pltpu, "CORE_PARALLEL", None)
    if num_cores >= 2 and grid[0] > 1 and core_parallel is not None:
        preferred_semantics = (core_parallel,)          # actually shards grid across the 2 TCs
    elif grid[0] > 1:
        preferred_semantics = ("parallel",)
    else:
        preferred_semantics = ("arbitrary",)

    x2d = x.reshape(rows, _LANES)                       # free layout op on contiguous data

    def _run(semantics):
        return pl.pallas_call(
            _exp_kernel,
            out_shape=jax.ShapeDtypeStruct((rows, _LANES), orig_dtype),
            grid=grid,
            in_specs=[pl.BlockSpec((tr, _LANES), lambda i: (i, 0))],
            out_specs=pl.BlockSpec((tr, _LANES), lambda i: (i, 0)),
            compiler_params=pltpu.CompilerParams(
                dimension_semantics=semantics,
                vmem_limit_bytes=vmem_limit,
            ),
            cost_estimate=pl.CostEstimate(
                flops=0,
                transcendentals=n,
                bytes_accessed=2 * n * itemsize,
            ),
        )(x2d)

    try:
        out2d = _run(preferred_semantics)
    except Exception:
        # Safety net: fall back to plain sequential semantics if the preferred
        # (e.g. CORE_PARALLEL) lowering is rejected on this jax/chip combo.
        out2d = _run(("arbitrary",))

    return out2d.reshape(orig_shape)


class Exponential:
    """Drop-in analogue of the PyTorch module: forward(x) = exp(x)."""

    def __call__(self, x: jax.Array) -> jax.Array:
        return exponential(x)


if __name__ == "__main__":
    key = jax.random.PRNGKey(0)

    # NCHW input, same convention as the PyTorch module would receive.
    x = jax.random.normal(key, (2, 4, 16, 16), dtype=jnp.float32)
    # Force the Pallas path even for this small test shape so the kernel runs.
    y = jax.block_until_ready(exponential(x, min_pallas_elems=0))
    y_ref = jnp.exp(x)
    assert y.shape == x.shape and y.dtype == x.dtype
    assert jnp.allclose(y, y_ref, rtol=1e-6, atol=1e-6)

    # Larger shape exercises the multi-step grid path (default threshold, still
    # goes through the kernel since n >> 64K).
    x2 = jax.random.normal(jax.random.PRNGKey(1), (8, 32, 64, 64), dtype=jnp.float32)
    y2 = jax.block_until_ready(exponential(x2))
    assert jnp.allclose(y2, jnp.exp(x2), rtol=1e-6, atol=1e-6)

    # Unaligned / tiny bf16 input exercises the jnp.exp fallback path.
    x3 = jax.random.normal(jax.random.PRNGKey(2), (3, 5, 7), dtype=jnp.bfloat16)
    y3 = jax.block_until_ready(exponential(x3))
    assert jnp.allclose(y3.astype(jnp.float32), jnp.exp(x3).astype(jnp.float32),
                        rtol=2e-2, atol=2e-2)

    print("KERNEL_OK")
</pallas_src>

<mosaic_0001>
module attributes {stable_mosaic.version = 11 : i64} {
  func.func @_exp_kernel(%arg0: i32, %arg1: memref<16x128xf32, #tpu.memory_space<vmem>>, %arg2: memref<16x128xf32, #tpu.memory_space<vmem>>) attributes {dimension_semantics = [#tpu.dimension_semantics<arbitrary>], iteration_bounds = array<i64: 1>, scalar_prefetch = 0 : i64, scratch_operands = 0 : i64, tpu.core_type = #tpu.core_type<tc>, window_params = [{transform_indices = @transform_0, window_bounds = array<i64: 16, 128>}, {transform_indices = @transform_1, window_bounds = array<i64: 16, 128>}]} {
    %c0 = arith.constant 0 : index
    %c0_0 = arith.constant 0 : index
    %0 = vector.load %arg1[%c0, %c0_0] : memref<16x128xf32, #tpu.memory_space<vmem>>, vector<16x128xf32>
    %1 = math.exp %0 : vector<16x128xf32>
    %c0_1 = arith.constant 0 : index
    %c0_2 = arith.constant 0 : index
    %2 = vector.load %arg2[%c0_1, %c0_2] : memref<16x128xf32, #tpu.memory_space<vmem>>, vector<16x128xf32>
    tpu.vector_store %arg2[%c0_1, %c0_2], %1 {strides = array<i32>} : memref<16x128xf32, #tpu.memory_space<vmem>>, vector<16x128xf32>,
    return
  }
  func.func @transform_0(%arg0: i32) -> (i32, i32) {
    %c0_i32 = arith.constant 0 : i32
    %c0_i32_0 = arith.constant 0 : i32
    return %arg0, %c0_i32 : i32, i32
  }
  func.func @transform_1(%arg0: i32) -> (i32, i32) {
    %c0_i32 = arith.constant 0 : i32
    %c0_i32_0 = arith.constant 0 : i32
    return %arg0, %c0_i32 : i32, i32
  }
}

module attributes {stable_mosaic.version = 11 : i64} {
  func.func @_exp_kernel(%arg0: i32, %arg1: memref<16x128xf32, #tpu.memory_space<vmem>>, %arg2: memref<16x128xf32, #tpu.memory_space<vmem>>) attributes {dimension_semantics = [#tpu.dimension_semantics<arbitrary>], iteration_bounds = array<i64: 1>, scalar_prefetch = 0 : i64, scratch_operands = 0 : i64, tpu.core_type = #tpu.core_type<tc>, window_params = [{transform_indices = @transform_0, window_bounds = array<i64: 16, 128>}, {transform_indices = @transform_1, window_bounds = array<i64: 16, 128>}]} {
    %c0 = arith.constant 0 : index
    %c0_0 = arith.constant 0 : index
    %0 = vector.load %arg1[%c0, %c0_0] : memref<16x128xf32, #tpu.memory_space<vmem>>, vector<16x128xf32>
    %1 = math.exp %0 : vector<16x128xf32>
    %c0_1 = arith.constant 0 : index
    %c0_2 = arith.constant 0 : index
    %2 = vector.load %arg2[%c0_1, %c0_2] : memref<16x128xf32, #tpu.memory_space<vmem>>, vector<16x128xf32>
    tpu.vector_store %arg2[%c0_1, %c0_2], %1 {strides = array<i32>} : memref<16x128xf32, #tpu.memory_space<vmem>>, vector<16x128xf32>,
    return
  }
  func.func @transform_0(%arg0: i32) -> (i32, i32) {
    %c0_i32 = arith.constant 0 : i32
    %c0_i32_0 = arith.constant 0 : i32
    return %arg0, %c0_i32 : i32, i32
  }
  func.func @transform_1(%arg0: i32) -> (i32, i32) {
    %c0_i32 = arith.constant 0 : i32
    %c0_i32_0 = arith.constant 0 : i32
    return %arg0, %c0_i32 : i32, i32
  }
}

</mosaic_0001>

<llo_original>
// kernel: tpu_custom_call.1
$region0: #{tpu_custom_call.1}
  #allocation0 [shape = 'u32[]', space=smem, size = 0x4, offset = 0x4, fixed_abs, tag = 'smem constant byte address 0x4 - core index']
  #allocation1 [shape = 'u32[144,128]{1,0:T(1,128)}', space=vmem, size = 0x12000, scoped, tag = 'internal scratch']
  %s0 = inlined_call_operand.hbm [shape: f32[16,128], index: 0, kind: input, shape index: {}]
  %s1 = inlined_call_operand.hbm [shape: f32[16,128], index: 1, kind: output, shape index: {}]
  %s2 = sld [smem:[#allocation0]]
  $region18: #{tpu_custom_call.1} parent=0
    _
  %s4 = ssub.s32 1, %s2
  %s5 = scalar_select 0, %s4, %s2
  $region1: #{tpu_custom_call.1} parent=0
    #allocation2 [shape = 'u8[8192]{0}', space=vmem, size = 0x2000, scoped, tag = 'input window, operand 0, single buffered']
    #allocation3 [shape = 's32[1]{0}', space=sflag, size = 0x4, scoped, tag = 'scoped memory for tpu_custom_call.1']
    #allocation4 [shape = 's32[1]{0}', space=sflag, size = 0x4, scoped, tag = 'scoped memory for tpu_custom_call.1']
    #allocation5 [shape = 'u8[8192]{0}', space=vmem, size = 0x2000, scoped, tag = 'output window, operand 0, single buffered']
    %6 = vsyncpa [#allocation3], 0
    %7 = vsyncpa [#allocation4], 0
    // Predicated region
    $region2: #{tpu_custom_call.1} parent=1 // pred_check
      _
    $region3: #{tpu_custom_call.1} parent=1 // pred_check_branch
      %9 = sbr.rel (0) target = $region5
    $region4: #{tpu_custom_call.1} parent=1 // pred_region
      %s11 = ssub.s32 256, 256
      %12 = vsyncadd [#allocation3], %s11
      %s13 = sshll.u32 [#allocation2], 4
      %s14 = int_to_ptr.vmem [resolvable:$true] %s13
      %19 = dma.hbm_to_vmem [thread:$0]  %s0, 256, %s14, [#allocation3], 128, 128, 8
    $region5: #{tpu_custom_call.1} parent=1 // pred_fallthru
      _
    // Predicated region
    $region6: #{tpu_custom_call.1} parent=1 // pred_check
      _
    $region7: #{tpu_custom_call.1} parent=1 // pred_check_branch
      %21 = sbr.rel (0) target = $region9
    $region8: #{tpu_custom_call.1} parent=1 // pred_region
      %22 = dma.done [#allocation3], 256
    $region9: #{tpu_custom_call.1} parent=1 // pred_fallthru
      _
    %v23 = vld [vmem:[#allocation2] sm:$0xff]
    %v24 = vld [vmem:[#allocation2 + $0x8] sm:$0xff]
    %v25 = vmul.f32 %v23, 1.442695
    %v26 = vpow.pop %v25
    %v27 = vmul.f32 %v24, 1.442695
    %v28 = vpow.pop %v27
    %29 = vst [vmem:[#allocation5] sm:$0xff] %v26
    %30 = vst [vmem:[#allocation5 + $0x8] sm:$0xff] %v28
    // Predicated region
    $region10: #{tpu_custom_call.1} parent=1 // pred_check
      _
    $region11: #{tpu_custom_call.1} parent=1 // pred_check_branch
      %32 = sbr.rel (0) target = $region13
    $region12: #{tpu_custom_call.1} parent=1 // pred_region
      %s34 = ssub.s32 256, 256
      %35 = vsyncadd [#allocation4], %s34
      %s36 = sshll.u32 [#allocation5], 4
      %s37 = int_to_ptr.vmem [resolvable:$true] %s36
      %42 = dma.vmem_to_hbm [thread:$0]  %s37, 256, %s1, [#allocation4], 128, 128, 8
    $region13: #{tpu_custom_call.1} parent=1 // pred_fallthru
      _
    // Predicated region
    $region14: #{tpu_custom_call.1} parent=1 // pred_check
      _
    $region15: #{tpu_custom_call.1} parent=1 // pred_check_branch
      %44 = sbr.rel (0) target = $region17
    $region16: #{tpu_custom_call.1} parent=1 // pred_region
      %45 = dma.done [#allocation4], 256
    $region17: #{tpu_custom_call.1} parent=1 // pred_fallthru
      _
    %46 = vsyncpa [#allocation3], 1
    %47 = vsyncpa [#allocation4], 1

// kernel: tpu_custom_call.1
$region0: #{tpu_custom_call.1}
  #allocation0 [shape = 'u32[]', space=smem, size = 0x4, offset = 0x4, fixed_abs, tag = 'smem constant byte address 0x4 - core index']
  #allocation1 [shape = 'u32[144,128]{1,0:T(1,128)}', space=vmem, size = 0x12000, scoped, tag = 'internal scratch']
  %s0 = inlined_call_operand.hbm [shape: f32[16,128], index: 0, kind: input, shape index: {}]
  %s1 = inlined_call_operand.hbm [shape: f32[16,128], index: 1, kind: output, shape index: {}]
  %s2 = sld [smem:[#allocation0]]
  $region18: #{tpu_custom_call.1} parent=0
    _
  %s4 = ssub.s32 1, %s2
  %s5 = scalar_select 0, %s4, %s2
  $region1: #{tpu_custom_call.1} parent=0
    #allocation2 [shape = 'u8[8192]{0}', space=vmem, size = 0x2000, scoped, tag = 'input window, operand 0, single buffered']
    #allocation3 [shape = 's32[1]{0}', space=sflag, size = 0x4, scoped, tag = 'scoped memory for tpu_custom_call.1']
    #allocation4 [shape = 's32[1]{0}', space=sflag, size = 0x4, scoped, tag = 'scoped memory for tpu_custom_call.1']
    #allocation5 [shape = 'u8[8192]{0}', space=vmem, size = 0x2000, scoped, tag = 'output window, operand 0, single buffered']
    %6 = vsyncpa [#allocation3], 0
    %7 = vsyncpa [#allocation4], 0
    // Predicated region
    $region2: #{tpu_custom_call.1} parent=1 // pred_check
      _
    $region3: #{tpu_custom_call.1} parent=1 // pred_check_branch
      %9 = sbr.rel (0) target = $region5
    $region4: #{tpu_custom_call.1} parent=1 // pred_region
      %s11 = ssub.s32 256, 256
      %12 = vsyncadd [#allocation3], %s11
      %s13 = sshll.u32 [#allocation2], 4
      %s14 = int_to_ptr.vmem [resolvable:$true] %s13
      %19 = dma.hbm_to_vmem [thread:$0]  %s0, 256, %s14, [#allocation3], 128, 128, 8
    $region5: #{tpu_custom_call.1} parent=1 // pred_fallthru
      _
    // Predicated region
    $region6: #{tpu_custom_call.1} parent=1 // pred_check
      _
    $region7: #{tpu_custom_call.1} parent=1 // pred_check_branch
      %21 = sbr.rel (0) target = $region9
    $region8: #{tpu_custom_call.1} parent=1 // pred_region
      %22 = dma.done [#allocation3], 256
    $region9: #{tpu_custom_call.1} parent=1 // pred_fallthru
      _
    %v23 = vld [vmem:[#allocation2] sm:$0xff]
    %v24 = vld [vmem:[#allocation2 + $0x8] sm:$0xff]
    %v25 = vmul.f32 %v23, 1.442695
    %v26 = vpow.pop %v25
    %v27 = vmul.f32 %v24, 1.442695
    %v28 = vpow.pop %v27
    %29 = vst [vmem:[#allocation5] sm:$0xff] %v26
    %30 = vst [vmem:[#allocation5 + $0x8] sm:$0xff] %v28
    // Predicated region
    $region10: #{tpu_custom_call.1} parent=1 // pred_check
      _
    $region11: #{tpu_custom_call.1} parent=1 // pred_check_branch
      %32 = sbr.rel (0) target = $region13
    $region12: #{tpu_custom_call.1} parent=1 // pred_region
      %s34 = ssub.s32 256, 256
      %35 = vsyncadd [#allocation4], %s34
      %s36 = sshll.u32 [#allocation5], 4
      %s37 = int_to_ptr.vmem [resolvable:$true] %s36
      %42 = dma.vmem_to_hbm [thread:$0]  %s37, 256, %s1, [#allocation4], 128, 128, 8
    $region13: #{tpu_custom_call.1} parent=1 // pred_fallthru
      _
    // Predicated region
    $region14: #{tpu_custom_call.1} parent=1 // pred_check
      _
    $region15: #{tpu_custom_call.1} parent=1 // pred_check_branch
      %44 = sbr.rel (0) target = $region17
    $region16: #{tpu_custom_call.1} parent=1 // pred_region
      %45 = dma.done [#allocation4], 256
    $region17: #{tpu_custom_call.1} parent=1 // pred_fallthru
      _
    %46 = vsyncpa [#allocation3], 1
    %47 = vsyncpa [#allocation4], 1

</llo_original>
